<compile_context>
chip_gen: v5e
topology: v5e:2x2
jax: 0.10.0
libtpu: 0.0.40
codegen_flags: <defaults>
</compile_context>

<pallas_src>
import jax
import jax.numpy as jnp
from jax.experimental import pallas as pl
from jax.experimental.pallas import tpu as pltpu

# ---------------- model hyper-parameters (match n_flow_model __init__) -------
INPUT_SHAPES = (32, 48, 64)
N_FLOWS = 3
N_FLOW_LAYERS = 2
N_FLOW_NEURONS = 64
N_FUSION_LAYERS = 2
N_FUSION_NEURONS = (128, 64)
OUTPUT_NEURONS = 7
BATCH = 8

DTYPE = jnp.float32
MATMUL_DTYPE = jnp.float32   # set to jnp.bfloat16 for large-batch MXU-bound use
LANES = 128
PAD_IN = N_FLOWS * LANES     # 384: packed-input width (one 128-lane segment per flow)
N_WBLOCKS = 11               # 6 flow + 3 fusion0-split + 1 fusion1 + 1 output
N_BROWS = 16                 # 9 real bias rows, padded to a multiple of 8 sublanes
NEG_INF = -1e30

# weight-block indices in w_slab        bias-row indices in b_slab
#  0 w00   1 w01   (flow 0)              0 b00  1 b01
#  2 w10   3 w11   (flow 1)              2 b10  3 b11
#  4 w20   5 w21   (flow 2)              4 b20  5 b21
#  6..8   wf0 split by flow              6 bf0
#  9 wf1                                 7 bf1
# 10 wo                                  8 bo (cols 7:128 forced to -1e30)


# ---------------------------- Pallas kernel ----------------------------------
def _nflow_kernel(x_ref, w_ref, b_ref, out_ref):
    x = x_ref[...]                                    # (BM, 384)
    x0 = x[:, 0 * LANES:1 * LANES]                    # (BM, 128), cols 32:128 zero
    x1 = x[:, 1 * LANES:2 * LANES]                    # cols 48:128 zero
    x2 = x[:, 2 * LANES:3 * LANES]                    # cols 64:128 zero

    def lin(h, wi, bi):
        # every weight block is a full 128x128 tile; zero padding is a no-op.
        return (jnp.dot(h.astype(MATMUL_DTYPE), w_ref[wi].astype(MATMUL_DTYPE),
                        preferred_element_type=jnp.float32)
                + b_ref[bi:bi + 1, :])

    relu = lambda z: jnp.maximum(z, 0.0)

    # three flows: Linear -> ReLU -> Linear -> ReLU (padded cols stay 0)
    h0 = relu(lin(relu(lin(x0, 0, 0)), 1, 1))
    h1 = relu(lin(relu(lin(x1, 2, 2)), 3, 3))
    h2 = relu(lin(relu(lin(x2, 4, 4)), 5, 5))

    # fusion layer 0: tanh(concat([h0,h1,h2]) @ Wf0 + bf0), concat expressed as
    # a sum of per-flow partial matmuls (no lane-axis concatenate).
    f = (jnp.dot(h0.astype(MATMUL_DTYPE), w_ref[6].astype(MATMUL_DTYPE),
                 preferred_element_type=jnp.float32)
         + jnp.dot(h1.astype(MATMUL_DTYPE), w_ref[7].astype(MATMUL_DTYPE),
                   preferred_element_type=jnp.float32)
         + jnp.dot(h2.astype(MATMUL_DTYPE), w_ref[8].astype(MATMUL_DTYPE),
                   preferred_element_type=jnp.float32)
         + b_ref[6:7, :])
    f = jnp.tanh(f)

    # fusion layer 1: tanh (padded cols: tanh(0) = 0)
    f = jnp.tanh(lin(f, 9, 7))

    # output layer + softmax over 128 lanes; padded lanes carry bias -1e30 so
    # exp() underflows to exactly 0 and the denominator only sees real logits.
    logits = lin(f, 10, 8)
    z = logits - jnp.max(logits, axis=-1, keepdims=True)
    e = jnp.exp(z)
    out_ref[...] = (e * pl.reciprocal(jnp.sum(e, axis=-1, keepdims=True))
                    ).astype(out_ref.dtype)


# ------------------------------ wrapper ---------------------------------------
def _choose_bm(b):
    """Pick (padded_batch, batch_block) — single block up to 256 rows, else tile."""
    b_pad = -(-b // 8) * 8
    if b_pad <= 256:
        return b_pad, b_pad
    bm = 256
    return -(-b // bm) * bm, bm


@jax.jit
def n_flow_forward(flow_0, flow_1, flow_2, w_slab, b_slab):
    b = flow_0.shape[0]
    # glue: torch forward .squeeze()'s each flow input -> 2D [B, D]
    x0 = flow_0.reshape(b, -1)
    x1 = flow_1.reshape(b, -1)
    x2 = flow_2.reshape(b, -1)

    b_pad, bm = _choose_bm(b)

    # one lane-dense input slab: each flow in its own 128-lane segment.
    x = jnp.zeros((b_pad, PAD_IN), DTYPE)
    x = x.at[:b, 0 * LANES:0 * LANES + INPUT_SHAPES[0]].set(x0)
    x = x.at[:b, 1 * LANES:1 * LANES + INPUT_SHAPES[1]].set(x1)
    x = x.at[:b, 2 * LANES:2 * LANES + INPUT_SHAPES[2]].set(x2)

    out = pl.pallas_call(
        _nflow_kernel,
        out_shape=jax.ShapeDtypeStruct((b_pad, LANES), DTYPE),
        grid=(b_pad // bm,),
        in_specs=[
            pl.BlockSpec((bm, PAD_IN), lambda i: (i, 0)),
            # weights/biases: constant index_map -> resident across batch steps
            pl.BlockSpec((N_WBLOCKS, LANES, LANES), lambda i: (0, 0, 0)),
            pl.BlockSpec((N_BROWS, LANES), lambda i: (0, 0)),
        ],
        out_specs=pl.BlockSpec((bm, LANES), lambda i: (i, 0)),
        compiler_params=pltpu.CompilerParams(
            dimension_semantics=("parallel",),
            vmem_limit_bytes=8 << 20,
        ),
    )(x, w_slab, b_slab)

    return out[:b, :OUTPUT_NEURONS]


# ---------------------- parameter init & host-side packing --------------------
def init_params(key):
    """Deterministic init; weights stored as (in_features, out_features)."""
    keys = iter(jax.random.split(key, 32))

    def dense(d_in, d_out):
        w = jax.random.normal(next(keys), (d_in, d_out), DTYPE) * (1.0 / jnp.sqrt(d_in))
        b = jax.random.normal(next(keys), (1, d_out), DTYPE) * 0.01
        return w, b

    params = []
    for i in range(N_FLOWS):
        w1, b1 = dense(INPUT_SHAPES[i], N_FLOW_NEURONS)
        w2, b2 = dense(N_FLOW_NEURONS, N_FLOW_NEURONS)
        params += [w1, b1, w2, b2]

    wf0, bf0 = dense(N_FLOWS * N_FLOW_NEURONS, N_FUSION_NEURONS[0])
    wf0a = wf0[0 * N_FLOW_NEURONS:1 * N_FLOW_NEURONS]
    wf0b = wf0[1 * N_FLOW_NEURONS:2 * N_FLOW_NEURONS]
    wf0c = wf0[2 * N_FLOW_NEURONS:3 * N_FLOW_NEURONS]
    params += [wf0a, wf0b, wf0c, bf0]

    wf1, bf1 = dense(N_FUSION_NEURONS[0], N_FUSION_NEURONS[1])
    params += [wf1, bf1]

    wo, bo = dense(N_FUSION_NEURONS[1], OUTPUT_NEURONS)
    params += [wo, bo]
    return params


def pack_params(params):
    """Pack all Linear weights/biases into two pre-padded lane-dense slabs."""
    (w00, b00, w01, b01,
     w10, b10, w11, b11,
     w20, b20, w21, b21,
     wf0a, wf0b, wf0c, bf0,
     wf1, bf1, wo, bo) = params

    def blk(w):
        out = jnp.zeros((LANES, LANES), MATMUL_DTYPE)
        return out.at[:w.shape[0], :w.shape[1]].set(w.astype(MATMUL_DTYPE))

    w_slab = jnp.stack([blk(w) for w in
                        (w00, w01, w10, w11, w20, w21,
                         wf0a, wf0b, wf0c, wf1, wo)])            # (11, 128, 128)

    b_slab = jnp.zeros((N_BROWS, LANES), DTYPE)
    for i, bias in enumerate((b00, b01, b10, b11, b20, b21, bf0, bf1)):
        b_slab = b_slab.at[i, :bias.shape[-1]].set(bias.reshape(-1))
    # output-layer bias row: padded lanes get -1e30 so softmax zeroes them out.
    b_slab = b_slab.at[8, :].set(NEG_INF)
    b_slab = b_slab.at[8, :OUTPUT_NEURONS].set(bo.reshape(-1))
    return w_slab, b_slab


# ---------------------- plain-JAX reference (sanity) --------------------------
def reference_forward(flow_0, flow_1, flow_2, params):
    b = flow_0.shape[0]
    flow_0 = flow_0.reshape(b, -1)
    flow_1 = flow_1.reshape(b, -1)
    flow_2 = flow_2.reshape(b, -1)
    (w00, b00, w01, b01,
     w10, b10, w11, b11,
     w20, b20, w21, b21,
     wf0a, wf0b, wf0c, bf0,
     wf1, bf1, wo, bo) = params

    def mlp(x, w1, b1, w2, b2):
        h = jnp.maximum(x @ w1 + b1, 0.0)
        return jnp.maximum(h @ w2 + b2, 0.0)

    h0 = mlp(flow_0, w00, b00, w01, b01)
    h1 = mlp(flow_1, w10, b10, w11, b11)
    h2 = mlp(flow_2, w20, b20, w21, b21)
    cat = jnp.concatenate([h0, h1, h2], axis=-1)
    wf0 = jnp.concatenate([wf0a, wf0b, wf0c], axis=0)
    f = jnp.tanh(cat @ wf0 + bf0)
    f = jnp.tanh(f @ wf1 + bf1)
    return jax.nn.softmax(f @ wo + bo, axis=-1)


if __name__ == "__main__":
    key = jax.random.PRNGKey(0)
    k_p, k0, k1, k2 = jax.random.split(key, 4)

    params = init_params(k_p)
    w_slab, b_slab = pack_params(params)   # packed once, outside the jit

    # inputs: (B, 1, D) like the torch module (forward .squeeze()'s them)
    flow_0 = jax.random.normal(k0, (BATCH, 1, INPUT_SHAPES[0]), DTYPE)
    flow_1 = jax.random.normal(k1, (BATCH, 1, INPUT_SHAPES[1]), DTYPE)
    flow_2 = jax.random.normal(k2, (BATCH, 1, INPUT_SHAPES[2]), DTYPE)

    out = n_flow_forward(flow_0, flow_1, flow_2, w_slab, b_slab)
    jax.block_until_ready(out)

    ref = reference_forward(flow_0, flow_1, flow_2, params)
    assert out.shape == (BATCH, OUTPUT_NEURONS)
    assert jnp.allclose(jnp.sum(out, axis=-1), 1.0, atol=1e-5)
    assert jnp.allclose(out, ref, atol=1e-5, rtol=1e-5)

    print("KERNEL_OK")
</pallas_src>

<mosaic_0001>
module attributes {stable_mosaic.version = 11 : i64} {
  func.func @_nflow_kernel(%arg0: i32, %arg1: memref<8x384xf32, #tpu.memory_space<vmem>>, %arg2: memref<11x128x128xf32, #tpu.memory_space<vmem>>, %arg3: memref<16x128xf32, #tpu.memory_space<vmem>>, %arg4: memref<8x128xf32, #tpu.memory_space<vmem>>) attributes {dimension_semantics = [#tpu.dimension_semantics<parallel>], iteration_bounds = array<i64: 1>, scalar_prefetch = 0 : i64, scratch_operands = 0 : i64, tpu.core_type = #tpu.core_type<tc>, window_params = [{transform_indices = @transform_0, window_bounds = array<i64: 8, 384>}, {pipeline_mode = #tpu.pipeline_mode<synchronous>, transform_indices = @transform_1, window_bounds = array<i64: 11, 128, 128>}, {pipeline_mode = #tpu.pipeline_mode<synchronous>, transform_indices = @transform_2, window_bounds = array<i64: 16, 128>}, {transform_indices = @transform_3, window_bounds = array<i64: 8, 128>}]} {
    %c0 = arith.constant 0 : index
    %c0_0 = arith.constant 0 : index
    %0 = vector.load %arg1[%c0, %c0_0] : memref<8x384xf32, #tpu.memory_space<vmem>>, vector<8x384xf32>
    %1 = vector.extract_strided_slice %0 {offsets = [0, 0], sizes = [8, 128], strides = [1, 1]} : vector<8x384xf32> to vector<8x128xf32>
    %2 = vector.extract_strided_slice %0 {offsets = [0, 128], sizes = [8, 128], strides = [1, 1]} : vector<8x384xf32> to vector<8x128xf32>
    %3 = vector.extract_strided_slice %0 {offsets = [0, 256], sizes = [8, 128], strides = [1, 1]} : vector<8x384xf32> to vector<8x128xf32>
    %c0_1 = arith.constant 0 : index
    %c0_2 = arith.constant 0 : index
    %c0_3 = arith.constant 0 : index
    %4 = vector.load %arg2[%c0_1, %c0_2, %c0_3] : memref<11x128x128xf32, #tpu.memory_space<vmem>>, vector<1x128x128xf32>
    %5 = vector.shape_cast %4 : vector<1x128x128xf32> to vector<128x128xf32>
    %cst = arith.constant dense<0.000000e+00> : vector<8x128xf32>
    %6 = tpu.matmul %1, %5, %cst {dimension_numbers = #tpu.dot_dimension_numbers<[1], [0], [0], [1], [0, 0, 1, 1], [], []>} : vector<8x128xf32>, vector<128x128xf32>, vector<8x128xf32> -> vector<8x128xf32>
    %c0_4 = arith.constant 0 : index
    %c0_5 = arith.constant 0 : index
    %7 = vector.load %arg3[%c0_4, %c0_5] : memref<16x128xf32, #tpu.memory_space<vmem>>, vector<1x128xf32>
    %8 = vector.broadcast %7 : vector<1x128xf32> to vector<8x128xf32>
    %9 = arith.addf %6, %8 : vector<8x128xf32>
    %cst_6 = arith.constant 0.000000e+00 : f32
    %10 = vector.broadcast %cst_6 : f32 to vector<8x128xf32>
    %11 = arith.maximumf %9, %10 : vector<8x128xf32>
    %c1 = arith.constant 1 : index
    %c0_7 = arith.constant 0 : index
    %c0_8 = arith.constant 0 : index
    %12 = vector.load %arg2[%c1, %c0_7, %c0_8] : memref<11x128x128xf32, #tpu.memory_space<vmem>>, vector<1x128x128xf32>
    %13 = vector.shape_cast %12 : vector<1x128x128xf32> to vector<128x128xf32>
    %cst_9 = arith.constant dense<0.000000e+00> : vector<8x128xf32>
    %14 = tpu.matmul %11, %13, %cst_9 {dimension_numbers = #tpu.dot_dimension_numbers<[1], [0], [0], [1], [0, 0, 1, 1], [], []>} : vector<8x128xf32>, vector<128x128xf32>, vector<8x128xf32> -> vector<8x128xf32>
    %c1_10 = arith.constant 1 : index
    %c0_11 = arith.constant 0 : index
    %15 = vector.load %arg3[%c1_10, %c0_11] : memref<16x128xf32, #tpu.memory_space<vmem>>, vector<1x128xf32>
    %16 = vector.broadcast %15 : vector<1x128xf32> to vector<8x128xf32>
    %17 = arith.addf %14, %16 : vector<8x128xf32>
    %cst_12 = arith.constant 0.000000e+00 : f32
    %18 = vector.broadcast %cst_12 : f32 to vector<8x128xf32>
    %19 = arith.maximumf %17, %18 : vector<8x128xf32>
    %c2 = arith.constant 2 : index
    %c0_13 = arith.constant 0 : index
    %c0_14 = arith.constant 0 : index
    %20 = vector.load %arg2[%c2, %c0_13, %c0_14] : memref<11x128x128xf32, #tpu.memory_space<vmem>>, vector<1x128x128xf32>
    %21 = vector.shape_cast %20 : vector<1x128x128xf32> to vector<128x128xf32>
    %cst_15 = arith.constant dense<0.000000e+00> : vector<8x128xf32>
    %22 = tpu.matmul %2, %21, %cst_15 {dimension_numbers = #tpu.dot_dimension_numbers<[1], [0], [0], [1], [0, 0, 1, 1], [], []>} : vector<8x128xf32>, vector<128x128xf32>, vector<8x128xf32> -> vector<8x128xf32>
    %c2_16 = arith.constant 2 : index
    %c0_17 = arith.constant 0 : index
    %23 = vector.load %arg3[%c2_16, %c0_17] : memref<16x128xf32, #tpu.memory_space<vmem>>, vector<1x128xf32>
    %24 = vector.broadcast %23 : vector<1x128xf32> to vector<8x128xf32>
    %25 = arith.addf %22, %24 : vector<8x128xf32>
    %cst_18 = arith.constant 0.000000e+00 : f32
    %26 = vector.broadcast %cst_18 : f32 to vector<8x128xf32>
    %27 = arith.maximumf %25, %26 : vector<8x128xf32>
    %c3 = arith.constant 3 : index
    %c0_19 = arith.constant 0 : index
    %c0_20 = arith.constant 0 : index
    %28 = vector.load %arg2[%c3, %c0_19, %c0_20] : memref<11x128x128xf32, #tpu.memory_space<vmem>>, vector<1x128x128xf32>
    %29 = vector.shape_cast %28 : vector<1x128x128xf32> to vector<128x128xf32>
    %cst_21 = arith.constant dense<0.000000e+00> : vector<8x128xf32>
    %30 = tpu.matmul %27, %29, %cst_21 {dimension_numbers = #tpu.dot_dimension_numbers<[1], [0], [0], [1], [0, 0, 1, 1], [], []>} : vector<8x128xf32>, vector<128x128xf32>, vector<8x128xf32> -> vector<8x128xf32>
    %c3_22 = arith.constant 3 : index
    %c0_23 = arith.constant 0 : index
    %31 = vector.load %arg3[%c3_22, %c0_23] : memref<16x128xf32, #tpu.memory_space<vmem>>, vector<1x128xf32>
    %32 = vector.broadcast %31 : vector<1x128xf32> to vector<8x128xf32>
    %33 = arith.addf %30, %32 : vector<8x128xf32>
    %cst_24 = arith.constant 0.000000e+00 : f32
    %34 = vector.broadcast %cst_24 : f32 to vector<8x128xf32>
    %35 = arith.maximumf %33, %34 : vector<8x128xf32>
    %c4 = arith.constant 4 : index
    %c0_25 = arith.constant 0 : index
    %c0_26 = arith.constant 0 : index
    %36 = vector.load %arg2[%c4, %c0_25, %c0_26] : memref<11x128x128xf32, #tpu.memory_space<vmem>>, vector<1x128x128xf32>
    %37 = vector.shape_cast %36 : vector<1x128x128xf32> to vector<128x128xf32>
    %cst_27 = arith.constant dense<0.000000e+00> : vector<8x128xf32>
    %38 = tpu.matmul %3, %37, %cst_27 {dimension_numbers = #tpu.dot_dimension_numbers<[1], [0], [0], [1], [0, 0, 1, 1], [], []>} : vector<8x128xf32>, vector<128x128xf32>, vector<8x128xf32> -> vector<8x128xf32>
    %c4_28 = arith.constant 4 : index
    %c0_29 = arith.constant 0 : index
    %39 = vector.load %arg3[%c4_28, %c0_29] : memref<16x128xf32, #tpu.memory_space<vmem>>, vector<1x128xf32>
    %40 = vector.broadcast %39 : vector<1x128xf32> to vector<8x128xf32>
    %41 = arith.addf %38, %40 : vector<8x128xf32>
    %cst_30 = arith.constant 0.000000e+00 : f32
    %42 = vector.broadcast %cst_30 : f32 to vector<8x128xf32>
    %43 = arith.maximumf %41, %42 : vector<8x128xf32>
    %c5 = arith.constant 5 : index
    %c0_31 = arith.constant 0 : index
    %c0_32 = arith.constant 0 : index
    %44 = vector.load %arg2[%c5, %c0_31, %c0_32] : memref<11x128x128xf32, #tpu.memory_space<vmem>>, vector<1x128x128xf32>
    %45 = vector.shape_cast %44 : vector<1x128x128xf32> to vector<128x128xf32>
    %cst_33 = arith.constant dense<0.000000e+00> : vector<8x128xf32>
    %46 = tpu.matmul %43, %45, %cst_33 {dimension_numbers = #tpu.dot_dimension_numbers<[1], [0], [0], [1], [0, 0, 1, 1], [], []>} : vector<8x128xf32>, vector<128x128xf32>, vector<8x128xf32> -> vector<8x128xf32>
    %c5_34 = arith.constant 5 : index
    %c0_35 = arith.constant 0 : index
    %47 = vector.load %arg3[%c5_34, %c0_35] : memref<16x128xf32, #tpu.memory_space<vmem>>, vector<1x128xf32>
    %48 = vector.broadcast %47 : vector<1x128xf32> to vector<8x128xf32>
    %49 = arith.addf %46, %48 : vector<8x128xf32>
    %cst_36 = arith.constant 0.000000e+00 : f32
    %50 = vector.broadcast %cst_36 : f32 to vector<8x128xf32>
    %51 = arith.maximumf %49, %50 : vector<8x128xf32>
    %c6 = arith.constant 6 : index
    %c0_37 = arith.constant 0 : index
    %c0_38 = arith.constant 0 : index
    %52 = vector.load %arg2[%c6, %c0_37, %c0_38] : memref<11x128x128xf32, #tpu.memory_space<vmem>>, vector<1x128x128xf32>
    %53 = vector.shape_cast %52 : vector<1x128x128xf32> to vector<128x128xf32>
    %cst_39 = arith.constant dense<0.000000e+00> : vector<8x128xf32>
    %54 = tpu.matmul %19, %53, %cst_39 {dimension_numbers = #tpu.dot_dimension_numbers<[1], [0], [0], [1], [0, 0, 1, 1], [], []>} : vector<8x128xf32>, vector<128x128xf32>, vector<8x128xf32> -> vector<8x128xf32>
    %c7 = arith.constant 7 : index
    %c0_40 = arith.constant 0 : index
    %c0_41 = arith.constant 0 : index
    %55 = vector.load %arg2[%c7, %c0_40, %c0_41] : memref<11x128x128xf32, #tpu.memory_space<vmem>>, vector<1x128x128xf32>
    %56 = vector.shape_cast %55 : vector<1x128x128xf32> to vector<128x128xf32>
    %cst_42 = arith.constant dense<0.000000e+00> : vector<8x128xf32>
    %57 = tpu.matmul %35, %56, %cst_42 {dimension_numbers = #tpu.dot_dimension_numbers<[1], [0], [0], [1], [0, 0, 1, 1], [], []>} : vector<8x128xf32>, vector<128x128xf32>, vector<8x128xf32> -> vector<8x128xf32>
    %58 = arith.addf %54, %57 : vector<8x128xf32>
    %c8 = arith.constant 8 : index
    %c0_43 = arith.constant 0 : index
    %c0_44 = arith.constant 0 : index
    %59 = vector.load %arg2[%c8, %c0_43, %c0_44] : memref<11x128x128xf32, #tpu.memory_space<vmem>>, vector<1x128x128xf32>
    %60 = vector.shape_cast %59 : vector<1x128x128xf32> to vector<128x128xf32>
    %cst_45 = arith.constant dense<0.000000e+00> : vector<8x128xf32>
    %61 = tpu.matmul %51, %60, %cst_45 {dimension_numbers = #tpu.dot_dimension_numbers<[1], [0], [0], [1], [0, 0, 1, 1], [], []>} : vector<8x128xf32>, vector<128x128xf32>, vector<8x128xf32> -> vector<8x128xf32>
    %62 = arith.addf %58, %61 : vector<8x128xf32>
    %c6_46 = arith.constant 6 : index
    %c0_47 = arith.constant 0 : index
    %63 = vector.load %arg3[%c6_46, %c0_47] : memref<16x128xf32, #tpu.memory_space<vmem>>, vector<1x128xf32>
    %64 = vector.broadcast %63 : vector<1x128xf32> to vector<8x128xf32>
    %65 = arith.addf %62, %64 : vector<8x128xf32>
    %66 = math.tanh %65 : vector<8x128xf32>
    %c9 = arith.constant 9 : index
    %c0_48 = arith.constant 0 : index
    %c0_49 = arith.constant 0 : index
    %67 = vector.load %arg2[%c9, %c0_48, %c0_49] : memref<11x128x128xf32, #tpu.memory_space<vmem>>, vector<1x128x128xf32>
    %68 = vector.shape_cast %67 : vector<1x128x128xf32> to vector<128x128xf32>
    %cst_50 = arith.constant dense<0.000000e+00> : vector<8x128xf32>
    %69 = tpu.matmul %66, %68, %cst_50 {dimension_numbers = #tpu.dot_dimension_numbers<[1], [0], [0], [1], [0, 0, 1, 1], [], []>} : vector<8x128xf32>, vector<128x128xf32>, vector<8x128xf32> -> vector<8x128xf32>
    %c7_51 = arith.constant 7 : index
    %c0_52 = arith.constant 0 : index
    %70 = vector.load %arg3[%c7_51, %c0_52] : memref<16x128xf32, #tpu.memory_space<vmem>>, vector<1x128xf32>
    %71 = vector.broadcast %70 : vector<1x128xf32> to vector<8x128xf32>
    %72 = arith.addf %69, %71 : vector<8x128xf32>
    %73 = math.tanh %72 : vector<8x128xf32>
    %c10 = arith.constant 10 : index
    %c0_53 = arith.constant 0 : index
    %c0_54 = arith.constant 0 : index
    %74 = vector.load %arg2[%c10, %c0_53, %c0_54] : memref<11x128x128xf32, #tpu.memory_space<vmem>>, vector<1x128x128xf32>
    %75 = vector.shape_cast %74 : vector<1x128x128xf32> to vector<128x128xf32>
    %cst_55 = arith.constant dense<0.000000e+00> : vector<8x128xf32>
    %76 = tpu.matmul %73, %75, %cst_55 {dimension_numbers = #tpu.dot_dimension_numbers<[1], [0], [0], [1], [0, 0, 1, 1], [], []>} : vector<8x128xf32>, vector<128x128xf32>, vector<8x128xf32> -> vector<8x128xf32>
    %c8_56 = arith.constant 8 : index
    %c0_57 = arith.constant 0 : index
    %77 = vector.load %arg3[%c8_56, %c0_57] : memref<16x128xf32, #tpu.memory_space<vmem>>, vector<1x128xf32>
    %78 = vector.broadcast %77 : vector<1x128xf32> to vector<8x128xf32>
    %79 = arith.addf %76, %78 : vector<8x128xf32>
    %cst_58 = arith.constant dense<0xFF800000> : vector<8xf32>
    %80 = vector.multi_reduction <maximumf>, %79, %cst_58 [1] : vector<8x128xf32> to vector<8xf32>
    %81 = vector.shape_cast %80 : vector<8xf32> to vector<8x1xf32>
    %82 = vector.broadcast %81 : vector<8x1xf32> to vector<8x128xf32>
    %83 = arith.subf %79, %82 : vector<8x128xf32>
    %84 = math.exp %83 : vector<8x128xf32>
    %cst_59 = arith.constant dense<0.000000e+00> : vector<8xf32>
    %85 = vector.multi_reduction <add>, %84, %cst_59 [1] : vector<8x128xf32> to vector<8xf32>
    %86 = vector.shape_cast %85 : vector<8xf32> to vector<8x1xf32>
    %87 = tpu.reciprocal %86 : vector<8x1xf32> -> vector<8x1xf32>
    %88 = vector.broadcast %87 : vector<8x1xf32> to vector<8x128xf32>
    %89 = arith.mulf %84, %88 : vector<8x128xf32>
    %c0_60 = arith.constant 0 : index
    %c0_61 = arith.constant 0 : index
    %90 = vector.load %arg4[%c0_60, %c0_61] : memref<8x128xf32, #tpu.memory_space<vmem>>, vector<8x128xf32>
    tpu.vector_store %arg4[%c0_60, %c0_61], %89 {strides = array<i32>} : memref<8x128xf32, #tpu.memory_space<vmem>>, vector<8x128xf32>,
    return
  }
  func.func @transform_0(%arg0: i32) -> (i32, i32) {
    %c0_i32 = arith.constant 0 : i32
    %c0_i32_0 = arith.constant 0 : i32
    return %arg0, %c0_i32 : i32, i32
  }
  func.func @transform_1(%arg0: i32) -> (i32, i32, i32) {
    %c0_i32 = arith.constant 0 : i32
    %c0_i32_0 = arith.constant 0 : i32
    %c0_i32_1 = arith.constant 0 : i32
    %c0_i32_2 = arith.constant 0 : i32
    return %c0_i32, %c0_i32_0, %c0_i32_1 : i32, i32, i32
  }
  func.func @transform_2(%arg0: i32) -> (i32, i32) {
    %c0_i32 = arith.constant 0 : i32
    %c0_i32_0 = arith.constant 0 : i32
    %c0_i32_1 = arith.constant 0 : i32
    return %c0_i32, %c0_i32_0 : i32, i32
  }
  func.func @transform_3(%arg0: i32) -> (i32, i32) {
    %c0_i32 = arith.constant 0 : i32
    %c0_i32_0 = arith.constant 0 : i32
    return %arg0, %c0_i32 : i32, i32
  }
}

</mosaic_0001>

<llo_original>
// kernel: n_flow_forward.1
$region0: #{n_flow_forward.1}
  #allocation0 [shape = 'u32[]', space=smem, size = 0x4, offset = 0x4, fixed_abs, tag = 'smem constant byte address 0x4 - core index']
  #allocation1 [shape = 'u32[72,128]{1,0:T(1,128)}', space=vmem, size = 0x9000, scoped, tag = 'internal scratch']
  %s0 = inlined_call_operand.vmem [shape: f32[8,384], index: 0, kind: input, shape index: {}]
  %s1 = inlined_call_operand.hbm [shape: f32[11,128,128], index: 1, kind: input, shape index: {}]
  %s2 = inlined_call_operand.vmem [shape: f32[16,128], index: 2, kind: input, shape index: {}]
  %s3 = inlined_call_operand.hbm [shape: f32[8,128], index: 3, kind: output, shape index: {}]
  %s4 = sld [smem:[#allocation0]]
  $region26: #{n_flow_forward.1} parent=0
    _
  %s6 = ssub.s32 1, %s4
  %s7 = scalar_select 0, %s6, %s4
  $region1: #{n_flow_forward.1} parent=0
    #allocation2 [shape = 'u8[720896]{0}', space=vmem, size = 0xb0000, scoped, tag = 'input window, operand 1, single buffered']
    #allocation3 [shape = 's32[1]{0}', space=sflag, size = 0x4, scoped, tag = 'scoped memory for n_flow_forward.1']
    #allocation4 [shape = 's32[1]{0}', space=sflag, size = 0x4, scoped, tag = 'scoped memory for n_flow_forward.1']
    #allocation5 [shape = 'u8[4096]{0}', space=vmem, size = 0x1000, scoped, tag = 'output window, operand 0, single buffered']
    %8 = vsyncpa [#allocation3], 0
    %9 = vsyncpa [#allocation4], 0
    // Predicated region
    $region2: #{n_flow_forward.1} parent=1 // pred_check
      _
    $region3: #{n_flow_forward.1} parent=1 // pred_check_branch
      %11 = sbr.rel (0) target = $region5
    $region4: #{n_flow_forward.1} parent=1 // pred_region
      _
    $region5: #{n_flow_forward.1} parent=1 // pred_fallthru
      _
    // Predicated region
    $region6: #{n_flow_forward.1} parent=1 // pred_check
      _
    $region7: #{n_flow_forward.1} parent=1 // pred_check_branch
      %13 = sbr.rel (0) target = $region9
    $region8: #{n_flow_forward.1} parent=1 // pred_region
      %15 = vsyncadd [#allocation3], 0
      %s16 = sshll.u32 %s1, 4
      %s17 = int_to_ptr.hbm [resolvable:$true] %s16
      %s18 = sshll.u32 [#allocation2], 4
      %s19 = int_to_ptr.vmem [resolvable:$true] %s18
      %24 = dma.hbm_to_vmem [thread:$0]  %s17, 22528, %s19, [#allocation3], 128, 128, 8
    $region9: #{n_flow_forward.1} parent=1 // pred_fallthru
      _
    // Predicated region
    $region10: #{n_flow_forward.1} parent=1 // pred_check
      _
    $region11: #{n_flow_forward.1} parent=1 // pred_check_branch
      %26 = sbr.rel (0) target = $region13
    $region12: #{n_flow_forward.1} parent=1 // pred_region
      _
    $region13: #{n_flow_forward.1} parent=1 // pred_fallthru
      _
    // Predicated region
    $region14: #{n_flow_forward.1} parent=1 // pred_check
      _
    $region15: #{n_flow_forward.1} parent=1 // pred_check_branch
      %28 = sbr.rel (0) target = $region17
    $region16: #{n_flow_forward.1} parent=1 // pred_region
      %30 = dma.done [#allocation3], 22528
    $region17: #{n_flow_forward.1} parent=1 // pred_fallthru
      _
    %v31 = vld [vmem:[%s0] sm:$0xff]
    %v32 = vld [vmem:[%s0 + $0x8] sm:$0xff]
    %v33 = vld [vmem:[%s0 + $0x10] sm:$0xff]
    %v34 = vld [vmem:[#allocation2] sm:$0xff]
    %v35 = vld [vmem:[#allocation2 + $0x8] sm:$0xff]
    %v36 = vld [vmem:[#allocation2 + $0x10] sm:$0xff]
    %v37 = vld [vmem:[#allocation2 + $0x18] sm:$0xff]
    %v38 = vld [vmem:[#allocation2 + $0x20] sm:$0xff]
    %v39 = vld [vmem:[#allocation2 + $0x28] sm:$0xff]
    %v40 = vld [vmem:[#allocation2 + $0x30] sm:$0xff]
    %v41 = vld [vmem:[#allocation2 + $0x38] sm:$0xff]
    %v42 = vld [vmem:[#allocation2 + $0x40] sm:$0xff]
    %v43 = vld [vmem:[#allocation2 + $0x48] sm:$0xff]
    %v44 = vld [vmem:[#allocation2 + $0x50] sm:$0xff]
    %v45 = vld [vmem:[#allocation2 + $0x58] sm:$0xff]
    %v46 = vld [vmem:[#allocation2 + $0x60] sm:$0xff]
    %v47 = vld [vmem:[#allocation2 + $0x68] sm:$0xff]
    %v48 = vld [vmem:[#allocation2 + $0x70] sm:$0xff]
    %v49 = vld [vmem:[#allocation2 + $0x78] sm:$0xff]
    %v50 = vld [vmem:[%s2] sm:$0x1]
    %v51 = vperm.slane %v50, 0
    %52 = vmatpush.msra.mxu0 %v49
    %53 = vmatpush.msra.mxu0 %v48
    %54 = vmatpush.msra.mxu0 %v47
    %55 = vmatpush.msra.mxu0 %v46
    %56 = vmatpush.msra.mxu0 %v45
    %57 = vmatpush.msra.mxu0 %v44
    %58 = vmatpush.msra.mxu0 %v43
    %59 = vmatpush.msra.mxu0 %v42
    %60 = vmatpush.msra.mxu0 %v41
    %61 = vmatpush.msra.mxu0 %v40
    %62 = vmatpush.msra.mxu0 %v39
    %63 = vmatpush.msra.mxu0 %v38
    %64 = vmatpush.msra.mxu0 %v37
    %65 = vmatpush.msra.mxu0 %v36
    %66 = vmatpush.msra.mxu0 %v35
    %67 = vmatpush.msra.mxu0 %v34
    %68 = vmatmul.f32.gmra.mxu0 %v31
    %v69 = vpop.f32.mrf.mxu0
    %v70 = vadd.f32 %v51, %v69
    %71 = vdwg.mxu0
    %v72 = vmax.f32 %v70, 0.0
    %s73 = scalar_lea.vmem [#allocation2], 128
    %v74 = vld [vmem:[%s73] sm:$0xff]
    %v75 = vld [vmem:[%s73 + $0x8] sm:$0xff]
    %v76 = vld [vmem:[%s73 + $0x10] sm:$0xff]
    %v77 = vld [vmem:[%s73 + $0x18] sm:$0xff]
    %v78 = vld [vmem:[%s73 + $0x20] sm:$0xff]
    %v79 = vld [vmem:[%s73 + $0x28] sm:$0xff]
    %v80 = vld [vmem:[%s73 + $0x30] sm:$0xff]
    %v81 = vld [vmem:[%s73 + $0x38] sm:$0xff]
    %v82 = vld [vmem:[%s73 + $0x40] sm:$0xff]
    %v83 = vld [vmem:[%s73 + $0x48] sm:$0xff]
    %v84 = vld [vmem:[%s73 + $0x50] sm:$0xff]
    %v85 = vld [vmem:[%s73 + $0x58] sm:$0xff]
    %v86 = vld [vmem:[%s73 + $0x60] sm:$0xff]
    %v87 = vld [vmem:[%s73 + $0x68] sm:$0xff]
    %v88 = vld [vmem:[%s73 + $0x70] sm:$0xff]
    %v89 = vld [vmem:[%s73 + $0x78] sm:$0xff]
    %v90 = vld [vmem:[%s2 + $0x1] sm:$0x1]
    %v91 = vperm.slane %v90, 0
    %92 = vmatpush.msra.mxu0 %v89
    %93 = vmatpush.msra.mxu0 %v88
    %94 = vmatpush.msra.mxu0 %v87
    %95 = vmatpush.msra.mxu0 %v86
    %96 = vmatpush.msra.mxu0 %v85
    %97 = vmatpush.msra.mxu0 %v84
    %98 = vmatpush.msra.mxu0 %v83
    %99 = vmatpush.msra.mxu0 %v82
    %100 = vmatpush.msra.mxu0 %v81
    %101 = vmatpush.msra.mxu0 %v80
    %102 = vmatpush.msra.mxu0 %v79
    %103 = vmatpush.msra.mxu0 %v78
    %104 = vmatpush.msra.mxu0 %v77
    %105 = vmatpush.msra.mxu0 %v76
    %106 = vmatpush.msra.mxu0 %v75
    %107 = vmatpush.msra.mxu0 %v74
    %108 = vmatmul.f32.gmra.mxu0 %v72
    %v109 = vpop.f32.mrf.mxu0
    %v110 = vadd.f32 %v91, %v109
    %111 = vdwg.mxu0
    %v112 = vmax.f32 %v110, 0.0
    %s113 = scalar_lea.vmem [#allocation2], 256
    %v114 = vld [vmem:[%s113] sm:$0xff]
    %v115 = vld [vmem:[%s113 + $0x8] sm:$0xff]
    %v116 = vld [vmem:[%s113 + $0x10] sm:$0xff]
    %v117 = vld [vmem:[%s113 + $0x18] sm:$0xff]
    %v118 = vld [vmem:[%s113 + $0x20] sm:$0xff]
    %v119 = vld [vmem:[%s113 + $0x28] sm:$0xff]
    %v120 = vld [vmem:[%s113 + $0x30] sm:$0xff]
    %v121 = vld [vmem:[%s113 + $0x38] sm:$0xff]
    %v122 = vld [vmem:[%s113 + $0x40] sm:$0xff]
    %v123 = vld [vmem:[%s113 + $0x48] sm:$0xff]
    %v124 = vld [vmem:[%s113 + $0x50] sm:$0xff]
    %v125 = vld [vmem:[%s113 + $0x58] sm:$0xff]
    %v126 = vld [vmem:[%s113 + $0x60] sm:$0xff]
    %v127 = vld [vmem:[%s113 + $0x68] sm:$0xff]
    %v128 = vld [vmem:[%s113 + $0x70] sm:$0xff]
    %v129 = vld [vmem:[%s113 + $0x78] sm:$0xff]
    %v130 = vld [vmem:[%s2 + $0x2] sm:$0x1]
    %v131 = vperm.slane %v130, 0
    %132 = vmatpush.msra.mxu0 %v129
    %133 = vmatpush.msra.mxu0 %v128
    %134 = vmatpush.msra.mxu0 %v127
    %135 = vmatpush.msra.mxu0 %v126
    %136 = vmatpush.msra.mxu0 %v125
    %137 = vmatpush.msra.mxu0 %v124
    %138 = vmatpush.msra.mxu0 %v123
    %139 = vmatpush.msra.mxu0 %v122
    %140 = vmatpush.msra.mxu0 %v121
    %141 = vmatpush.msra.mxu0 %v120
    %142 = vmatpush.msra.mxu0 %v119
    %143 = vmatpush.msra.mxu0 %v118
    %144 = vmatpush.msra.mxu0 %v117
    %145 = vmatpush.msra.mxu0 %v116
    %146 = vmatpush.msra.mxu0 %v115
    %147 = vmatpush.msra.mxu0 %v114
    %148 = vmatmul.f32.gmra.mxu0 %v32
    %v149 = vpop.f32.mrf.mxu0
    %v150 = vadd.f32 %v131, %v149
    %151 = vdwg.mxu0
    %v152 = vmax.f32 %v150, 0.0
    %s153 = scalar_lea.vmem [#allocation2], 384
    %v154 = vld [vmem:[%s153] sm:$0xff]
    %v155 = vld [vmem:[%s153 + $0x8] sm:$0xff]
    %v156 = vld [vmem:[%s153 + $0x10] sm:$0xff]
    %v157 = vld [vmem:[%s153 + $0x18] sm:$0xff]
    %v158 = vld [vmem:[%s153 + $0x20] sm:$0xff]
    %v159 = vld [vmem:[%s153 + $0x28] sm:$0xff]
    %v160 = vld [vmem:[%s153 + $0x30] sm:$0xff]
    %v161 = vld [vmem:[%s153 + $0x38] sm:$0xff]
    %v162 = vld [vmem:[%s153 + $0x40] sm:$0xff]
    %v163 = vld [vmem:[%s153 + $0x48] sm:$0xff]
    %v164 = vld [vmem:[%s153 + $0x50] sm:$0xff]
    %v165 = vld [vmem:[%s153 + $0x58] sm:$0xff]
    %v166 = vld [vmem:[%s153 + $0x60] sm:$0xff]
    %v167 = vld [vmem:[%s153 + $0x68] sm:$0xff]
    %v168 = vld [vmem:[%s153 + $0x70] sm:$0xff]
    %v169 = vld [vmem:[%s153 + $0x78] sm:$0xff]
    %v170 = vld [vmem:[%s2 + $0x3] sm:$0x1]
    %v171 = vperm.slane %v170, 0
    %172 = vmatpush.msra.mxu0 %v169
    %173 = vmatpush.msra.mxu0 %v168
    %174 = vmatpush.msra.mxu0 %v167
    %175 = vmatpush.msra.mxu0 %v166
    %176 = vmatpush.msra.mxu0 %v165
    %177 = vmatpush.msra.mxu0 %v164
    %178 = vmatpush.msra.mxu0 %v163
    %179 = vmatpush.msra.mxu0 %v162
    %180 = vmatpush.msra.mxu0 %v161
    %181 = vmatpush.msra.mxu0 %v160
    %182 = vmatpush.msra.mxu0 %v159
    %183 = vmatpush.msra.mxu0 %v158
    %184 = vmatpush.msra.mxu0 %v157
    %185 = vmatpush.msra.mxu0 %v156
    %186 = vmatpush.msra.mxu0 %v155
    %187 = vmatpush.msra.mxu0 %v154
    %188 = vmatmul.f32.gmra.mxu0 %v152
    %v189 = vpop.f32.mrf.mxu0
    %v190 = vadd.f32 %v171, %v189
    %191 = vdwg.mxu0
    %v192 = vmax.f32 %v190, 0.0
    %s193 = scalar_lea.vmem [#allocation2], 512
    %v194 = vld [vmem:[%s193] sm:$0xff]
    %v195 = vld [vmem:[%s193 + $0x8] sm:$0xff]
    %v196 = vld [vmem:[%s193 + $0x10] sm:$0xff]
    %v197 = vld [vmem:[%s193 + $0x18] sm:$0xff]
    %v198 = vld [vmem:[%s193 + $0x20] sm:$0xff]
    %v199 = vld [vmem:[%s193 + $0x28] sm:$0xff]
    %v200 = vld [vmem:[%s193 + $0x30] sm:$0xff]
    %v201 = vld [vmem:[%s193 + $0x38] sm:$0xff]
    %v202 = vld [vmem:[%s193 + $0x40] sm:$0xff]
    %v203 = vld [vmem:[%s193 + $0x48] sm:$0xff]
    %v204 = vld [vmem:[%s193 + $0x50] sm:$0xff]
    %v205 = vld [vmem:[%s193 + $0x58] sm:$0xff]
    %v206 = vld [vmem:[%s193 + $0x60] sm:$0xff]
    %v207 = vld [vmem:[%s193 + $0x68] sm:$0xff]
    %v208 = vld [vmem:[%s193 + $0x70] sm:$0xff]
    %v209 = vld [vmem:[%s193 + $0x78] sm:$0xff]
    %v210 = vld [vmem:[%s2 + $0x4] sm:$0x1]
    %v211 = vperm.slane %v210, 0
    %212 = vmatpush.msra.mxu0 %v209
    %213 = vmatpush.msra.mxu0 %v208
    %214 = vmatpush.msra.mxu0 %v207
    %215 = vmatpush.msra.mxu0 %v206
    %216 = vmatpush.msra.mxu0 %v205
    %217 = vmatpush.msra.mxu0 %v204
    %218 = vmatpush.msra.mxu0 %v203
    %219 = vmatpush.msra.mxu0 %v202
    %220 = vmatpush.msra.mxu0 %v201
    %221 = vmatpush.msra.mxu0 %v200
    %222 = vmatpush.msra.mxu0 %v199
    %223 = vmatpush.msra.mxu0 %v198
    %224 = vmatpush.msra.mxu0 %v197
    %225 = vmatpush.msra.mxu0 %v196
    %226 = vmatpush.msra.mxu0 %v195
    %227 = vmatpush.msra.mxu0 %v194
    %228 = vmatmul.f32.gmra.mxu0 %v33
    %v229 = vpop.f32.mrf.mxu0
    %v230 = vadd.f32 %v211, %v229
    %231 = vdwg.mxu0
    %v232 = vmax.f32 %v230, 0.0
    %s233 = scalar_lea.vmem [#allocation2], 640
    %v234 = vld [vmem:[%s233] sm:$0xff]
    %v235 = vld [vmem:[%s233 + $0x8] sm:$0xff]
    %v236 = vld [vmem:[%s233 + $0x10] sm:$0xff]
    %v237 = vld [vmem:[%s233 + $0x18] sm:$0xff]
    %v238 = vld [vmem:[%s233 + $0x20] sm:$0xff]
    %v239 = vld [vmem:[%s233 + $0x28] sm:$0xff]
    %v240 = vld [vmem:[%s233 + $0x30] sm:$0xff]
    %v241 = vld [vmem:[%s233 + $0x38] sm:$0xff]
    %v242 = vld [vmem:[%s233 + $0x40] sm:$0xff]
    %v243 = vld [vmem:[%s233 + $0x48] sm:$0xff]
    %v244 = vld [vmem:[%s233 + $0x50] sm:$0xff]
    %v245 = vld [vmem:[%s233 + $0x58] sm:$0xff]
    %v246 = vld [vmem:[%s233 + $0x60] sm:$0xff]
    %v247 = vld [vmem:[%s233 + $0x68] sm:$0xff]
    %v248 = vld [vmem:[%s233 + $0x70] sm:$0xff]
    %v249 = vld [vmem:[%s233 + $0x78] sm:$0xff]
    %v250 = vld [vmem:[%s2 + $0x5] sm:$0x1]
    %v251 = vperm.slane %v250, 0
    %252 = vmatpush.msra.mxu0 %v249
    %253 = vmatpush.msra.mxu0 %v248
    %254 = vmatpush.msra.mxu0 %v247
    %255 = vmatpush.msra.mxu0 %v246
    %256 = vmatpush.msra.mxu0 %v245
    %257 = vmatpush.msra.mxu0 %v244
    %258 = vmatpush.msra.mxu0 %v243
    %259 = vmatpush.msra.mxu0 %v242
    %260 = vmatpush.msra.mxu0 %v241
    %261 = vmatpush.msra.mxu0 %v240
    %262 = vmatpush.msra.mxu0 %v239
    %263 = vmatpush.msra.mxu0 %v238
    %264 = vmatpush.msra.mxu0 %v237
    %265 = vmatpush.msra.mxu0 %v236
    %266 = vmatpush.msra.mxu0 %v235
    %267 = vmatpush.msra.mxu0 %v234
    %268 = vmatmul.f32.gmra.mxu0 %v232
    %v269 = vpop.f32.mrf.mxu0
    %v270 = vadd.f32 %v251, %v269
    %271 = vdwg.mxu0
    %v272 = vmax.f32 %v270, 0.0
    %s273 = scalar_lea.vmem [#allocation2], 768
    %v274 = vld [vmem:[%s273] sm:$0xff]
    %v275 = vld [vmem:[%s273 + $0x8] sm:$0xff]
    %v276 = vld [vmem:[%s273 + $0x10] sm:$0xff]
    %v277 = vld [vmem:[%s273 + $0x18] sm:$0xff]
    %v278 = vld [vmem:[%s273 + $0x20] sm:$0xff]
    %v279 = vld [vmem:[%s273 + $0x28] sm:$0xff]
    %v280 = vld [vmem:[%s273 + $0x30] sm:$0xff]
    %v281 = vld [vmem:[%s273 + $0x38] sm:$0xff]
    %v282 = vld [vmem:[%s273 + $0x40] sm:$0xff]
    %v283 = vld [vmem:[%s273 + $0x48] sm:$0xff]
    %v284 = vld [vmem:[%s273 + $0x50] sm:$0xff]
    %v285 = vld [vmem:[%s273 + $0x58] sm:$0xff]
    %v286 = vld [vmem:[%s273 + $0x60] sm:$0xff]
    %v287 = vld [vmem:[%s273 + $0x68] sm:$0xff]
    %v288 = vld [vmem:[%s273 + $0x70] sm:$0xff]
    %v289 = vld [vmem:[%s273 + $0x78] sm:$0xff]
    %s290 = scalar_lea.vmem [#allocation2], 896
    %v291 = vld [vmem:[%s290] sm:$0xff]
    %v292 = vld [vmem:[%s290 + $0x8] sm:$0xff]
    %v293 = vld [vmem:[%s290 + $0x10] sm:$0xff]
    %v294 = vld [vmem:[%s290 + $0x18] sm:$0xff]
    %v295 = vld [vmem:[%s290 + $0x20] sm:$0xff]
    %v296 = vld [vmem:[%s290 + $0x28] sm:$0xff]
    %v297 = vld [vmem:[%s290 + $0x30] sm:$0xff]
    %v298 = vld [vmem:[%s290 + $0x38] sm:$0xff]
    %v299 = vld [vmem:[%s290 + $0x40] sm:$0xff]
    %v300 = vld [vmem:[%s290 + $0x48] sm:$0xff]
    %v301 = vld [vmem:[%s290 + $0x50] sm:$0xff]
    %v302 = vld [vmem:[%s290 + $0x58] sm:$0xff]
    %v303 = vld [vmem:[%s290 + $0x60] sm:$0xff]
    %v304 = vld [vmem:[%s290 + $0x68] sm:$0xff]
    %v305 = vld [vmem:[%s290 + $0x70] sm:$0xff]
    %v306 = vld [vmem:[%s290 + $0x78] sm:$0xff]
    %307 = vmatpush.msra.mxu0 %v306
    %308 = vmatpush.msra.mxu0 %v305
    %309 = vmatpush.msra.mxu0 %v304
    %310 = vmatpush.msra.mxu0 %v303
    %311 = vmatpush.msra.mxu0 %v302
    %312 = vmatpush.msra.mxu0 %v301
    %313 = vmatpush.msra.mxu0 %v300
    %314 = vmatpush.msra.mxu0 %v299
    %315 = vmatpush.msra.mxu0 %v298
    %316 = vmatpush.msra.mxu0 %v297
    %317 = vmatpush.msra.mxu0 %v296
    %318 = vmatpush.msra.mxu0 %v295
    %319 = vmatpush.msra.mxu0 %v294
    %320 = vmatpush.msra.mxu0 %v293
    %321 = vmatpush.msra.mxu0 %v292
    %322 = vmatpush.msra.mxu0 %v291
    %323 = vmatmul.f32.gmra.mxu0 %v192
    %v324 = vpop.f32.mrf.mxu0
    %v325 = vadd.f32 0.0, %v324
    %326 = vdwg.mxu0
    %327 = vmatpush.msra.mxu0 %v289
    %328 = vmatpush.msra.mxu0 %v288
    %329 = vmatpush.msra.mxu0 %v287
    %330 = vmatpush.msra.mxu0 %v286
    %331 = vmatpush.msra.mxu0 %v285
    %332 = vmatpush.msra.mxu0 %v284
    %333 = vmatpush.msra.mxu0 %v283
    %334 = vmatpush.msra.mxu0 %v282
    %335 = vmatpush.msra.mxu0 %v281
    %336 = vmatpush.msra.mxu0 %v280
    %337 = vmatpush.msra.mxu0 %v279
    %338 = vmatpush.msra.mxu0 %v278
    %339 = vmatpush.msra.mxu0 %v277
    %340 = vmatpush.msra.mxu0 %v276
    %341 = vmatpush.msra.mxu0 %v275
    %342 = vmatpush.msra.mxu0 %v274
    %343 = vmatmul.f32.gmra.mxu0 %v112
    %v344 = vpop.f32.mrf.mxu0
    %v345 = vadd.f32 %v325, %v344
    %346 = vdwg.mxu0
    %s347 = scalar_lea.vmem [#allocation2], 1024
    %v348 = vld [vmem:[%s347] sm:$0xff]
    %v349 = vld [vmem:[%s347 + $0x8] sm:$0xff]
    %v350 = vld [vmem:[%s347 + $0x10] sm:$0xff]
    %v351 = vld [vmem:[%s347 + $0x18] sm:$0xff]
    %v352 = vld [vmem:[%s347 + $0x20] sm:$0xff]
    %v353 = vld [vmem:[%s347 + $0x28] sm:$0xff]
    %v354 = vld [vmem:[%s347 + $0x30] sm:$0xff]
    %v355 = vld [vmem:[%s347 + $0x38] sm:$0xff]
    %v356 = vld [vmem:[%s347 + $0x40] sm:$0xff]
    %v357 = vld [vmem:[%s347 + $0x48] sm:$0xff]
    %v358 = vld [vmem:[%s347 + $0x50] sm:$0xff]
    %v359 = vld [vmem:[%s347 + $0x58] sm:$0xff]
    %v360 = vld [vmem:[%s347 + $0x60] sm:$0xff]
    %v361 = vld [vmem:[%s347 + $0x68] sm:$0xff]
    %v362 = vld [vmem:[%s347 + $0x70] sm:$0xff]
    %v363 = vld [vmem:[%s347 + $0x78] sm:$0xff]
    %364 = vmatpush.msra.mxu0 %v363
    %365 = vmatpush.msra.mxu0 %v362
    %366 = vmatpush.msra.mxu0 %v361
    %367 = vmatpush.msra.mxu0 %v360
    %368 = vmatpush.msra.mxu0 %v359
    %369 = vmatpush.msra.mxu0 %v358
    %370 = vmatpush.msra.mxu0 %v357
    %371 = vmatpush.msra.mxu0 %v356
    %372 = vmatpush.msra.mxu0 %v355
    %373 = vmatpush.msra.mxu0 %v354
    %374 = vmatpush.msra.mxu0 %v353
    %375 = vmatpush.msra.mxu0 %v352
    %376 = vmatpush.msra.mxu0 %v351
    %377 = vmatpush.msra.mxu0 %v350
    %378 = vmatpush.msra.mxu0 %v349
    %379 = vmatpush.msra.mxu0 %v348
    %380 = vmatmul.f32.gmra.mxu0 %v272
    %v381 = vpop.f32.mrf.mxu0
    %v382 = vadd.f32 0.0, %v381
    %383 = vdwg.mxu0
    %v384 = vadd.f32 %v345, %v382
    %v385 = vld [vmem:[%s2 + $0x6] sm:$0x1]
    %v386 = vperm.slane %v385, 0
    %v387 = vadd.f32 %v384, %v386
    %v388 = vtanh.pop %v387
    %s389 = scalar_lea.vmem [#allocation2], 1152
    %v390 = vld [vmem:[%s389] sm:$0xff]
    %v391 = vld [vmem:[%s389 + $0x8] sm:$0xff]
    %v392 = vld [vmem:[%s389 + $0x10] sm:$0xff]
    %v393 = vld [vmem:[%s389 + $0x18] sm:$0xff]
    %v394 = vld [vmem:[%s389 + $0x20] sm:$0xff]
    %v395 = vld [vmem:[%s389 + $0x28] sm:$0xff]
    %v396 = vld [vmem:[%s389 + $0x30] sm:$0xff]
    %v397 = vld [vmem:[%s389 + $0x38] sm:$0xff]
    %v398 = vld [vmem:[%s389 + $0x40] sm:$0xff]
    %v399 = vld [vmem:[%s389 + $0x48] sm:$0xff]
    %v400 = vld [vmem:[%s389 + $0x50] sm:$0xff]
    %v401 = vld [vmem:[%s389 + $0x58] sm:$0xff]
    %v402 = vld [vmem:[%s389 + $0x60] sm:$0xff]
    %v403 = vld [vmem:[%s389 + $0x68] sm:$0xff]
    %v404 = vld [vmem:[%s389 + $0x70] sm:$0xff]
    %v405 = vld [vmem:[%s389 + $0x78] sm:$0xff]
    %v406 = vld [vmem:[%s2 + $0x7] sm:$0x1]
    %v407 = vperm.slane %v406, 0
    %408 = vmatpush.msra.mxu0 %v405
    %409 = vmatpush.msra.mxu0 %v404
    %410 = vmatpush.msra.mxu0 %v403
    %411 = vmatpush.msra.mxu0 %v402
    %412 = vmatpush.msra.mxu0 %v401
    %413 = vmatpush.msra.mxu0 %v400
    %414 = vmatpush.msra.mxu0 %v399
    %415 = vmatpush.msra.mxu0 %v398
    %416 = vmatpush.msra.mxu0 %v397
    %417 = vmatpush.msra.mxu0 %v396
    %418 = vmatpush.msra.mxu0 %v395
    %419 = vmatpush.msra.mxu0 %v394
    %420 = vmatpush.msra.mxu0 %v393
    %421 = vmatpush.msra.mxu0 %v392
    %422 = vmatpush.msra.mxu0 %v391
    %423 = vmatpush.msra.mxu0 %v390
    %424 = vmatmul.f32.gmra.mxu0 %v388
    %v425 = vpop.f32.mrf.mxu0
    %v426 = vadd.f32 %v407, %v425
    %427 = vdwg.mxu0
    %v428 = vtanh.pop %v426
    %s429 = scalar_lea.vmem [#allocation2], 1280
    %v430 = vld [vmem:[%s429] sm:$0xff]
    %v431 = vld [vmem:[%s429 + $0x8] sm:$0xff]
    %v432 = vld [vmem:[%s429 + $0x10] sm:$0xff]
    %v433 = vld [vmem:[%s429 + $0x18] sm:$0xff]
    %v434 = vld [vmem:[%s429 + $0x20] sm:$0xff]
    %v435 = vld [vmem:[%s429 + $0x28] sm:$0xff]
    %v436 = vld [vmem:[%s429 + $0x30] sm:$0xff]
    %v437 = vld [vmem:[%s429 + $0x38] sm:$0xff]
    %v438 = vld [vmem:[%s429 + $0x40] sm:$0xff]
    %v439 = vld [vmem:[%s429 + $0x48] sm:$0xff]
    %v440 = vld [vmem:[%s429 + $0x50] sm:$0xff]
    %v441 = vld [vmem:[%s429 + $0x58] sm:$0xff]
    %v442 = vld [vmem:[%s429 + $0x60] sm:$0xff]
    %v443 = vld [vmem:[%s429 + $0x68] sm:$0xff]
    %v444 = vld [vmem:[%s429 + $0x70] sm:$0xff]
    %v445 = vld [vmem:[%s429 + $0x78] sm:$0xff]
    %v446 = vld [vmem:[%s2 + $0x8] sm:$0x1]
    %v447 = vperm.slane %v446, 0
    %448 = vmatpush.msra.mxu0 %v445
    %449 = vmatpush.msra.mxu0 %v444
    %450 = vmatpush.msra.mxu0 %v443
    %451 = vmatpush.msra.mxu0 %v442
    %452 = vmatpush.msra.mxu0 %v441
    %453 = vmatpush.msra.mxu0 %v440
    %454 = vmatpush.msra.mxu0 %v439
    %455 = vmatpush.msra.mxu0 %v438
    %456 = vmatpush.msra.mxu0 %v437
    %457 = vmatpush.msra.mxu0 %v436
    %458 = vmatpush.msra.mxu0 %v435
    %459 = vmatpush.msra.mxu0 %v434
    %460 = vmatpush.msra.mxu0 %v433
    %461 = vmatpush.msra.mxu0 %v432
    %462 = vmatpush.msra.mxu0 %v431
    %463 = vmatpush.msra.mxu0 %v430
    %464 = vmatmul.f32.gmra.mxu0 %v428
    %v465 = vpop.f32.mrf.mxu0
    %v466 = vadd.f32 %v447, %v465
    %467 = vdwg.mxu0
    %468 = vmax.xlane.f32.xlu0 %v466
    %v469 = vpop.xlane.xlu0 %468
    %v470 = vsub.f32 %v466, %v469
    %v471 = vmul.f32 %v470, 1.442695
    %v472 = vpow.pop %v471
    %473 = vadd.xlane.f32.xlu0 %v472
    %v474 = vpop.xlane.xlu0 %473
    %v475 = vrcp.pop %v474
    %v476 = vmul.f32 %v474, %v475
    %v477 = vsub.f32 1.0, %v476
    %v478 = vmul.f32 %v475, %v477
    %v479 = vadd.f32 %v475, %v478
    %vm480 = vweird.f32 %v474
    %vm481 = vweird.f32 %v475
    %vm482 = vmor %vm480, %vm481
    %v483 = vsel %vm482, %v475, %v479
    %v484 = vand.u32 2147483647, %v474
    %vm485 = vcmp.eq.f32.partialorder %v484, 8.507059e+37
    %v486 = vand.u32 %v474, 2147483648
    %v487 = vor.u32 1.1754944e-38, %v486
    %v488 = vsel %vm485, %v487, %v483
    %v489 = vmul.f32 %v472, %v488
    %490 = vst [vmem:[#allocation5] sm:$0xff] %v489
    // Predicated region
    $region18: #{n_flow_forward.1} parent=1 // pred_check
      _
    $region19: #{n_flow_forward.1} parent=1 // pred_check_branch
      %492 = sbr.rel (0) target = $region21
    $region20: #{n_flow_forward.1} parent=1 // pred_region
      %494 = vsyncadd [#allocation4], 0
      %s496 = sshll.u32 [#allocation5], 4
      %s497 = int_to_ptr.vmem [resolvable:$true] %s496
      %s498 = sshll.u32 %s3, 4
      %s499 = int_to_ptr.hbm [resolvable:$true] %s498
      %501 = dma.vmem_to_hbm [thread:$0]  %s497, 128, %s499, [#allocation4]
    $region21: #{n_flow_forward.1} parent=1 // pred_fallthru
      _
    // Predicated region
    $region22: #{n_flow_forward.1} parent=1 // pred_check
      _
    $region23: #{n_flow_forward.1} parent=1 // pred_check_branch
      %503 = sbr.rel (0) target = $region25
    $region24: #{n_flow_forward.1} parent=1 // pred_region
      %505 = dma.done [#allocation4], 128
    $region25: #{n_flow_forward.1} parent=1 // pred_fallthru
      _
    %506 = vsyncpa [#allocation3], 1
    %507 = vsyncpa [#allocation4], 1

</llo_original>
